<compile_context>
chip_gen: v7x
topology: tpu7x:2x2x1
jax: 0.10.0
libtpu: 0.0.40
codegen_flags: <defaults>
</compile_context>

<pallas_src>
import math
from functools import partial, lru_cache

import jax
import jax.numpy as jnp
from jax.experimental import pallas as pl
from jax.experimental.pallas import tpu as pltpu


# ----------------------------------------------------------------------------
# Chip-generation aware knobs
# ----------------------------------------------------------------------------
@lru_cache(maxsize=1)
def _chip_kind():
    try:
        return jax.devices()[0].device_kind.lower()
    except Exception:
        return ""


@lru_cache(maxsize=1)
def _vmem_limit_bytes():
    kind = _chip_kind()
    if "7" in kind:                       # v7x: 64 MiB/TC -> leave Mosaic headroom
        return 56 * 1024 * 1024
    if "v5" in kind or "v6" in kind:      # 128 MiB physical VMEM
        return 100 * 1024 * 1024
    return 64 * 1024 * 1024               # unknown / older: safe default


@lru_cache(maxsize=1)
def _use_bf16_exp():
    # bf16 EUP only on v6e / v7x; keep f32 softmax math on v5e and older.
    kind = _chip_kind()
    return ("v6" in kind) or ("7" in kind)


def _pick_tile(dim, pref, align):
    """Largest tile <= pref that divides `dim` and is a multiple of `align`.
    Falls back to the full dim (always a legal block shape)."""
    if dim <= pref:
        return dim
    t = (pref // align) * align
    while t >= align:
        if dim % t == 0:
            return t
        t -= align
    return dim


# ----------------------------------------------------------------------------
# Tiled linear kernel:  y = x @ wt + b     (x, wt already bf16; f32 accumulate)
# ----------------------------------------------------------------------------
def _linear_kernel(x_ref, wt_ref, b_ref, o_ref):
    y = jnp.dot(x_ref[...], wt_ref[...], preferred_element_type=jnp.float32)
    o_ref[...] = (y + b_ref[...]).astype(o_ref.dtype)


def pallas_linear(x, wt, b2, *, out_dtype=jnp.float32, tm=512, tn=512):
    """x: (N, din) bf16, wt: (din, dout) bf16 (pre-transposed), b2: (1, dout) f32."""
    N, din = x.shape
    dout = wt.shape[1]
    bm = _pick_tile(N, tm, 16)        # bf16 sublane tile = 16 rows
    bn = _pick_tile(dout, tn, 128)    # lane-dense output tile
    grid = (N // bm, dout // bn)
    # TODO(synk): add a K-loop ("arbitrary" grid axis + f32 VMEM accumulator)
    # once din reaches ~4-8K so operand residency fits v7x's 64 MiB VMEM.
    return pl.pallas_call(
        _linear_kernel,
        out_shape=jax.ShapeDtypeStruct((N, dout), out_dtype),
        grid=grid,
        in_specs=[
            pl.BlockSpec((bm, din), lambda i, j: (i, 0)),
            pl.BlockSpec((din, bn), lambda i, j: (0, j)),
            pl.BlockSpec((1, bn), lambda i, j: (0, j)),
        ],
        out_specs=pl.BlockSpec((bm, bn), lambda i, j: (i, j)),
        compiler_params=pltpu.CompilerParams(
            dimension_semantics=("parallel", "parallel"),
            vmem_limit_bytes=_vmem_limit_bytes()),
    )(x, wt, b2)


# ----------------------------------------------------------------------------
# Attention kernel: one (batch, query-tile) per grid step, all H heads at once.
#   q block (tq, 1, 1, H, D), k/v blocks (S, 1, 1, H, D)  (time-major, bf16)
#   optional attn-mask bias (tq, S) and key-padding bias (1, 1, S)
#   outputs: context (tq, 1, H, D) bf16 and optional head-avg weights (1, tq, S)
# ----------------------------------------------------------------------------
def _attention_kernel(*refs, has_attn_bias, has_kpm_bias, need_weights,
                      use_bf16_exp):
    q_ref, k_ref, v_ref = refs[0], refs[1], refs[2]
    idx = 3
    am_ref = kpm_ref = None
    if has_attn_bias:
        am_ref = refs[idx]; idx += 1
    if has_kpm_bias:
        kpm_ref = refs[idx]; idx += 1
    o_ref = refs[idx]; idx += 1
    w_ref = refs[idx] if need_weights else None

    tq, _, _, H, D = q_ref.shape
    S = k_ref.shape[0]

    # time-major -> head-major relayout done in VMEM (XLU slot), not as HBM
    # transposes in the wrapper.
    q = jnp.transpose(q_ref[...].reshape(tq, H, D), (1, 0, 2))   # (H, tq, D) bf16
    k = jnp.transpose(k_ref[...].reshape(S, H, D), (1, 0, 2))    # (H, S, D)  bf16
    v = jnp.transpose(v_ref[...].reshape(S, H, D), (1, 0, 2))    # (H, S, D)  bf16

    # scores on the MXU, f32 accumulate (1/sqrt(D) folded into the q projection)
    s = jnp.einsum("htd,hsd->hts", q, k, preferred_element_type=jnp.float32)
    if has_attn_bias:
        s = s + am_ref[...]                   # (tq, S) broadcasts over heads
    if has_kpm_bias:
        s = s + kpm_ref[...]                  # (1, 1, S) broadcasts

    # online-free softmax (whole-S rows resident); -1e9 masks stay finite.
    m = jnp.max(s, axis=-1, keepdims=True)
    if use_bf16_exp:
        # v6e/v7x: bf16 EUP ~2x exp throughput, halves the p intermediate.
        p = jnp.exp((s - m).astype(jnp.bfloat16))
    else:
        p = jnp.exp(s - m)                    # v5e: no bf16 EUP/VPU
    l = jnp.sum(p, axis=-1, keepdims=True, dtype=jnp.float32)
    inv = pl.reciprocal(l, approx=True)       # EUP slot; ~1e-3 rel. error

    # deferred normalization: only the (H, tq, D) context gets multiplied by inv.
    ctx = jnp.einsum("hts,hsd->htd", p.astype(v.dtype), v,
                     preferred_element_type=jnp.float32)
    o_ref[...] = jnp.transpose(ctx * inv, (1, 0, 2)).reshape(
        tq, 1, H, D).astype(o_ref.dtype)

    if need_weights:
        # head-averaged weights; 1/H is folded into the per-row reciprocal.
        w = jnp.sum(p * (inv * (1.0 / H)), axis=0)          # (tq, S) f32
        w_ref[...] = w.reshape(1, tq, S).astype(w_ref.dtype)


def pallas_attention(q_arr, k_arr, v_arr, q_idx, k_idx, v_idx,
                     attn_bias, kpm_bias, num_heads, need_weights=True,
                     weights_dtype=jnp.float32):
    """q_arr: (T, B, Cq, H, D) bf16; k_arr/v_arr: (S, B, Ck, H, D) bf16.
    q_idx/k_idx/v_idx select the packed q/k/v slot along axis 2 (fused QKV).
    attn_bias: (T, S) f32 additive or None; kpm_bias: (B, 1, S) f32 or None."""
    T, B, _, H, D = q_arr.shape
    S = k_arr.shape[0]

    tq = _pick_tile(T, 128, 16)     # bf16 sublane alignment
    grid = (B, T // tq)

    in_specs = [
        pl.BlockSpec((tq, 1, 1, H, D), lambda b, t, qi=q_idx: (t, b, qi, 0, 0)),
        pl.BlockSpec((S, 1, 1, H, D), lambda b, t, ki=k_idx: (0, b, ki, 0, 0)),
        pl.BlockSpec((S, 1, 1, H, D), lambda b, t, vi=v_idx: (0, b, vi, 0, 0)),
    ]
    inputs = [q_arr, k_arr, v_arr]
    has_attn_bias = attn_bias is not None
    has_kpm_bias = kpm_bias is not None
    if has_attn_bias:
        in_specs.append(pl.BlockSpec((tq, S), lambda b, t: (t, 0)))
        inputs.append(attn_bias)
    if has_kpm_bias:
        in_specs.append(pl.BlockSpec((1, 1, S), lambda b, t: (b, 0, 0)))
        inputs.append(kpm_bias)

    out_shapes = [jax.ShapeDtypeStruct((T, B, H, D), jnp.bfloat16)]
    out_specs = [pl.BlockSpec((tq, 1, H, D), lambda b, t: (t, b, 0, 0))]
    if need_weights:
        out_shapes.append(jax.ShapeDtypeStruct((B, T, S), weights_dtype))
        out_specs.append(pl.BlockSpec((1, tq, S), lambda b, t: (b, t, 0)))

    kernel = partial(_attention_kernel,
                     has_attn_bias=has_attn_bias, has_kpm_bias=has_kpm_bias,
                     need_weights=need_weights, use_bf16_exp=_use_bf16_exp())

    # TODO(synk): for production-long S on v7x (64 MiB VMEM) add flash-style
    # S-blocking (online softmax) / head-chunking for the need_weights=False
    # path and single-buffered K/V, so the (H,S,D) + f32 (H,tq,S) residents fit.
    res = pl.pallas_call(
        kernel,
        out_shape=tuple(out_shapes),
        grid=grid,
        in_specs=in_specs,
        out_specs=tuple(out_specs),
        compiler_params=pltpu.CompilerParams(
            dimension_semantics=("parallel", "parallel"),
            vmem_limit_bytes=_vmem_limit_bytes()),
    )(*inputs)
    if need_weights:
        return res[0], res[1]
    return res[0], None


# ----------------------------------------------------------------------------
# Parameter initialization (mimics fairseq xavier_uniform gains) + one-time prep
# ----------------------------------------------------------------------------
def _xavier_uniform(key, shape, gain=1.0):
    fan_out, fan_in = shape
    bound = gain * math.sqrt(6.0 / (fan_in + fan_out))
    return jax.random.uniform(key, shape, jnp.float32, -bound, bound)


def init_mha_params(key, embed_dim, kdim=None, vdim=None):
    kdim = embed_dim if kdim is None else kdim
    vdim = embed_dim if vdim is None else vdim
    ks = jax.random.split(key, 7)
    same = (kdim == embed_dim and vdim == embed_dim)
    g = 1.0 / math.sqrt(2.0) if same else 1.0
    return {
        "q_w": _xavier_uniform(ks[0], (embed_dim, embed_dim), gain=g),
        "k_w": _xavier_uniform(ks[1], (embed_dim, kdim), gain=g),
        "v_w": _xavier_uniform(ks[2], (embed_dim, vdim), gain=g),
        "out_w": _xavier_uniform(ks[3], (embed_dim, embed_dim), gain=1.0),
        "q_b": jax.random.uniform(ks[4], (embed_dim,), jnp.float32, -0.1, 0.1),
        "k_b": jax.random.uniform(ks[5], (embed_dim,), jnp.float32, -0.1, 0.1),
        "v_b": jax.random.uniform(ks[6], (embed_dim,), jnp.float32, -0.1, 0.1),
        "out_b": jnp.zeros((embed_dim,), jnp.float32),
    }


def prepare_mha_params(params, num_heads):
    """One-time prep: fold 1/sqrt(D) into the q projection, transpose + cast
    weights to bf16, and pre-concatenate the fused QKV projection (so none of
    this work happens per forward call)."""
    E = params["q_w"].shape[0]
    D = E // num_heads
    scaling = D ** -0.5
    q_w = params["q_w"] * scaling
    q_b = params["q_b"] * scaling
    prepared = {
        "num_heads": num_heads,
        "embed_dim": E,
        "q_wt": jnp.transpose(q_w).astype(jnp.bfloat16),
        "k_wt": jnp.transpose(params["k_w"]).astype(jnp.bfloat16),
        "v_wt": jnp.transpose(params["v_w"]).astype(jnp.bfloat16),
        "out_wt": jnp.transpose(params["out_w"]).astype(jnp.bfloat16),
        "q_b": q_b.reshape(1, E).astype(jnp.float32),
        "k_b": params["k_b"].reshape(1, E).astype(jnp.float32),
        "v_b": params["v_b"].reshape(1, E).astype(jnp.float32),
        "out_b": params["out_b"].reshape(1, E).astype(jnp.float32),
    }
    kdim = params["k_w"].shape[1]
    vdim = params["v_w"].shape[1]
    if kdim == E and vdim == E:
        prepared["qkv_wt"] = jnp.transpose(
            jnp.concatenate([q_w, params["k_w"], params["v_w"]], axis=0)
        ).astype(jnp.bfloat16)                                       # (E, 3E)
        prepared["qkv_b"] = jnp.concatenate(
            [q_b, params["k_b"], params["v_b"]]
        ).reshape(1, 3 * E).astype(jnp.float32)
    return prepared


# ----------------------------------------------------------------------------
# Full forward (fairseq MultiheadAttention.forward semantics)
# ----------------------------------------------------------------------------
def multihead_attention_forward(prepared, query, key, value,
                                key_padding_mask=None, attn_mask=None,
                                need_weights=True):
    """query: (T, B, E) f32; key/value: (S, B, *).
    Returns (attn_out (T,B,E) f32, head-averaged attn_weights (B,T,S) or None)."""
    T, B, E = query.shape
    H = prepared["num_heads"]
    assert E % H == 0
    D = E // H
    S = key.shape[0]

    if (key is query) and (value is query) and ("qkv_wt" in prepared):
        # self-attention fast path: one fused (E, 3E) projection; the result is
        # reshaped (free) to (T, B, 3, H, D) and sliced per block inside the
        # attention kernel -- no HBM transposes or slice copies.
        x = query.astype(jnp.bfloat16).reshape(T * B, E)
        qkv = pallas_linear(x, prepared["qkv_wt"], prepared["qkv_b"],
                            out_dtype=jnp.bfloat16)
        qkv5 = qkv.reshape(T, B, 3, H, D)
        q_arr, k_arr, v_arr = qkv5, qkv5, qkv5
        q_idx, k_idx, v_idx = 0, 1, 2
    else:
        xq = query.astype(jnp.bfloat16).reshape(T * B, E)
        xk = key.astype(jnp.bfloat16).reshape(S * B, key.shape[-1])
        xv = value.astype(jnp.bfloat16).reshape(S * B, value.shape[-1])
        q = pallas_linear(xq, prepared["q_wt"], prepared["q_b"],
                          out_dtype=jnp.bfloat16)
        k = pallas_linear(xk, prepared["k_wt"], prepared["k_b"],
                          out_dtype=jnp.bfloat16)
        v = pallas_linear(xv, prepared["v_wt"], prepared["v_b"],
                          out_dtype=jnp.bfloat16)
        q_arr = q.reshape(T, B, 1, H, D)
        k_arr = k.reshape(S, B, 1, H, D)
        v_arr = v.reshape(S, B, 1, H, D)
        q_idx = k_idx = v_idx = 0

    # Masks as small additive biases (no (B,T,S) HBM materialization):
    #   attn_mask -> (T, S) shared across batch; key_padding_mask -> (B, 1, S).
    attn_bias = None
    if attn_mask is not None:
        if attn_mask.dtype == jnp.bool_:
            attn_bias = jnp.where(attn_mask, -1e9, 0.0).astype(jnp.float32)
        else:
            attn_bias = attn_mask.astype(jnp.float32)
    kpm_bias = None
    if key_padding_mask is not None:
        kpm_bias = jnp.where(key_padding_mask.astype(bool), -1e9, 0.0
                             ).astype(jnp.float32).reshape(B, 1, S)

    ctx, attn_weights = pallas_attention(
        q_arr, k_arr, v_arr, q_idx, k_idx, v_idx,
        attn_bias, kpm_bias, H, need_weights=need_weights)

    # ctx is already (T, B, H, D) == (T, B, E): no HBM transpose before out proj.
    out = pallas_linear(ctx.reshape(T * B, E), prepared["out_wt"],
                        prepared["out_b"], out_dtype=jnp.float32).reshape(T, B, E)

    # TODO(synk): dropout (p>0) and incremental-state / static-kv fairseq paths
    # are not implemented (no-ops for the default inference forward).
    return out, attn_weights


# ----------------------------------------------------------------------------
# Pure-JAX f32 reference (same -1e9 mask convention) for the self-check.
# ----------------------------------------------------------------------------
def _ref_forward(params, query, key, value, H, key_padding_mask, attn_mask):
    T, B, E = query.shape
    S = key.shape[0]
    D = E // H
    scale = D ** -0.5
    q = query.reshape(T * B, E) @ params["q_w"].T + params["q_b"]
    k = key.reshape(S * B, key.shape[-1]) @ params["k_w"].T + params["k_b"]
    v = value.reshape(S * B, value.shape[-1]) @ params["v_w"].T + params["v_b"]
    q = (q * scale).reshape(T, B * H, D).transpose(1, 0, 2)
    k = k.reshape(S, B * H, D).transpose(1, 0, 2)
    v = v.reshape(S, B * H, D).transpose(1, 0, 2)
    s = jnp.einsum("btd,bsd->bts", q, k).reshape(B, H, T, S)
    bias = jnp.zeros((B, 1, T, S), jnp.float32)
    if attn_mask is not None:
        am = jnp.where(attn_mask, -1e9, 0.0) if attn_mask.dtype == jnp.bool_ \
            else attn_mask.astype(jnp.float32)
        bias = bias + am[None, None]
    if key_padding_mask is not None:
        bias = bias + jnp.where(key_padding_mask.astype(bool),
                                -1e9, 0.0)[:, None, None, :]
    s = s + bias
    w = jax.nn.softmax(s, axis=-1)
    a = jnp.einsum("bhts,bhsd->bhtd", w, v.reshape(B, H, S, D))
    a = a.transpose(2, 0, 1, 3).reshape(T, B, E)
    o = a.reshape(T * B, E) @ params["out_w"].T + params["out_b"]
    return o.reshape(T, B, E), w.mean(axis=1)


# ----------------------------------------------------------------------------
if __name__ == "__main__":
    # Small shapes: T=S=8, B=2, E=128, H=4 (head_dim=32)
    T, B, E, H = 8, 2, 128, 4
    key0 = jax.random.PRNGKey(0)
    k_params, k_q, k_kv = jax.random.split(key0, 3)

    raw_params = init_mha_params(k_params, E)
    params = prepare_mha_params(raw_params, H)
    query = jax.random.normal(k_q, (T, B, E), jnp.float32)

    # 1) self-attention, no masks, need_weights=True
    out, attn_w = multihead_attention_forward(params, query, query, query)
    jax.block_until_ready((out, attn_w))
    ref_out, ref_w = _ref_forward(raw_params, query, query, query, H, None, None)
    assert out.shape == (T, B, E) and attn_w.shape == (B, T, T)
    # bf16 MXU operands (and bf16 exp on v6e/v7x) -> relaxed tolerances vs f32 ref
    assert jnp.allclose(out, ref_out, atol=5e-2, rtol=5e-2)
    assert jnp.allclose(attn_w, ref_w, atol=2e-2, rtol=5e-2)

    # 2) causal attn_mask + key_padding_mask
    attn_mask = jnp.triu(jnp.ones((T, T), dtype=bool), k=1)
    kpm = jnp.zeros((B, T), dtype=bool).at[:, -1].set(True)
    out2, attn_w2 = multihead_attention_forward(
        params, query, query, query, key_padding_mask=kpm, attn_mask=attn_mask)
    jax.block_until_ready((out2, attn_w2))
    ref_out2, ref_w2 = _ref_forward(raw_params, query, query, query, H,
                                    kpm, attn_mask)
    assert jnp.allclose(out2, ref_out2, atol=5e-2, rtol=5e-2)
    assert jnp.allclose(attn_w2, ref_w2, atol=2e-2, rtol=5e-2)

    # 3) need_weights=False (performance path: no weights store at all)
    out3, w3 = multihead_attention_forward(params, query, query, query,
                                           need_weights=False)
    jax.block_until_ready(out3)
    assert w3 is None
    assert jnp.allclose(out3, ref_out, atol=5e-2, rtol=5e-2)

    # 4) encoder-decoder attention (separate key/value, S != T)
    S2 = 16
    kv = jax.random.normal(k_kv, (S2, B, E), jnp.float32)
    out4, attn_w4 = multihead_attention_forward(params, query, kv, kv)
    jax.block_until_ready((out4, attn_w4))
    ref_out4, ref_w4 = _ref_forward(raw_params, query, kv, kv, H, None, None)
    assert attn_w4.shape == (B, T, S2)
    assert jnp.allclose(out4, ref_out4, atol=5e-2, rtol=5e-2)
    assert jnp.allclose(attn_w4, ref_w4, atol=2e-2, rtol=5e-2)

    print("KERNEL_OK")
</pallas_src>

<mosaic_0001>
module attributes {stable_mosaic.version = 11 : i64} {
  func.func @_linear_kernel(%arg0: i32, %arg1: i32, %arg2: memref<16x128xbf16, #tpu.memory_space<vmem>>, %arg3: memref<128x384xbf16, #tpu.memory_space<vmem>>, %arg4: memref<1x384xf32, #tpu.memory_space<vmem>>, %arg5: memref<16x384xbf16, #tpu.memory_space<vmem>>) attributes {dimension_semantics = [#tpu.dimension_semantics<parallel>, #tpu.dimension_semantics<parallel>], iteration_bounds = array<i64: 1, 1>, scalar_prefetch = 0 : i64, scratch_operands = 0 : i64, tpu.core_type = #tpu.core_type<tc>, window_params = [{transform_indices = @transform_0, window_bounds = array<i64: 16, 128>}, {transform_indices = @transform_1, window_bounds = array<i64: 128, 384>}, {transform_indices = @transform_2, window_bounds = array<i64: 1, 384>}, {transform_indices = @transform_3, window_bounds = array<i64: 16, 384>}]} {
    %c0 = arith.constant 0 : index
    %c0_0 = arith.constant 0 : index
    %0 = vector.load %arg2[%c0, %c0_0] : memref<16x128xbf16, #tpu.memory_space<vmem>>, vector<16x128xbf16>
    %c0_1 = arith.constant 0 : index
    %c0_2 = arith.constant 0 : index
    %1 = vector.load %arg3[%c0_1, %c0_2] : memref<128x384xbf16, #tpu.memory_space<vmem>>, vector<128x384xbf16>
    %cst = arith.constant dense<0.000000e+00> : vector<16x384xf32>
    %2 = tpu.matmul %0, %1, %cst {dimension_numbers = #tpu.dot_dimension_numbers<[1], [0], [0], [1], [0, 0, 1, 1], [], []>} : vector<16x128xbf16>, vector<128x384xbf16>, vector<16x384xf32> -> vector<16x384xf32>
    %c0_3 = arith.constant 0 : index
    %c0_4 = arith.constant 0 : index
    %3 = vector.load %arg4[%c0_3, %c0_4] : memref<1x384xf32, #tpu.memory_space<vmem>>, vector<1x384xf32>
    %4 = vector.broadcast %3 : vector<1x384xf32> to vector<16x384xf32>
    %5 = arith.addf %2, %4 : vector<16x384xf32>
    %6 = arith.truncf %5 : vector<16x384xf32> to vector<16x384xbf16>
    %c0_5 = arith.constant 0 : index
    %c0_6 = arith.constant 0 : index
    %7 = vector.load %arg5[%c0_5, %c0_6] : memref<16x384xbf16, #tpu.memory_space<vmem>>, vector<16x384xbf16>
    tpu.vector_store %arg5[%c0_5, %c0_6], %6 {strides = array<i32>} : memref<16x384xbf16, #tpu.memory_space<vmem>>, vector<16x384xbf16>,
    return
  }
  func.func @transform_0(%arg0: i32, %arg1: i32) -> (i32, i32) {
    %c0_i32 = arith.constant 0 : i32
    %c0_i32_0 = arith.constant 0 : i32
    return %arg0, %c0_i32 : i32, i32
  }
  func.func @transform_1(%arg0: i32, %arg1: i32) -> (i32, i32) {
    %c0_i32 = arith.constant 0 : i32
    %c0_i32_0 = arith.constant 0 : i32
    return %c0_i32, %arg1 : i32, i32
  }
  func.func @transform_2(%arg0: i32, %arg1: i32) -> (i32, i32) {
    %c0_i32 = arith.constant 0 : i32
    %c0_i32_0 = arith.constant 0 : i32
    return %c0_i32, %arg1 : i32, i32
  }
  func.func @transform_3(%arg0: i32, %arg1: i32) -> (i32, i32) {
    %c0_i32 = arith.constant 0 : i32
    return %arg0, %arg1 : i32, i32
  }
}

</mosaic_0001>

<llo_original>
// kernel: tpu_custom_call.1
$region0: #{tpu_custom_call.1}
  #allocation0 [shape = 'u32[]', space=smem, size = 0x4, offset = 0x4, fixed_abs, tag = 'smem constant byte address 0x4 - core index']
  #allocation1 [shape = 'u32[144,128]{1,0:T(1,128)}', space=vmem, size = 0x12000, scoped, tag = 'internal scratch']
  %s0 = inlined_call_operand.hbm [shape: bf16[16,128], index: 0, kind: input, shape index: {}]
  %s1 = inlined_call_operand.hbm [shape: bf16[128,384], index: 1, kind: input, shape index: {}]
  %s2 = inlined_call_operand.hbm [shape: f32[1,384], index: 2, kind: input, shape index: {}]
  %s3 = inlined_call_operand.hbm [shape: bf16[16,384], index: 3, kind: output, shape index: {}]
  %s4 = sld [smem:[#allocation0]]
  $region34: #{tpu_custom_call.1} parent=0
    _
  %s6 = ssub.s32 1, %s4
  %s7 = scalar_select 0, %s6, %s4
  $region1: #{tpu_custom_call.1} parent=0
    #allocation2 [shape = 'u8[4096]{0}', space=vmem, size = 0x1000, scoped, tag = 'input window, operand 0, single buffered']
    #allocation3 [shape = 's32[1]{0}', space=sflag, size = 0x4, scoped, tag = 'scoped memory for tpu_custom_call.1']
    #allocation4 [shape = 's32[1]{0}', space=sflag, size = 0x4, scoped, tag = 'scoped memory for tpu_custom_call.1']
    #allocation5 [shape = 'u8[98304]{0}', space=vmem, size = 0x18000, scoped, tag = 'input window, operand 1, single buffered']
    #allocation6 [shape = 's32[1]{0}', space=sflag, size = 0x4, scoped, tag = 'scoped memory for tpu_custom_call.1']
    #allocation7 [shape = 'u8[1536]{0}', space=vmem, size = 0x800, scoped, tag = 'input window, operand 2, single buffered']
    #allocation8 [shape = 'u8[12288]{0}', space=vmem, size = 0x3000, scoped, tag = 'output window, operand 0, single buffered']
    %8 = vsyncpa [#allocation3], 0
    %9 = vsyncpa [#allocation6], 0
    %10 = vsyncpa [#allocation4], 0
    // Predicated region
    $region2: #{tpu_custom_call.1} parent=1 // pred_check
      _
    $region3: #{tpu_custom_call.1} parent=1 // pred_check_branch
      %12 = sbr.rel (0) target = $region5
    $region4: #{tpu_custom_call.1} parent=1 // pred_region
      %s14 = ssub.s32 128, 128
      %15 = vsyncadd [#allocation3], %s14
      %s16 = sshll.u32 [#allocation2], 4
      %s17 = int_to_ptr.vmem [resolvable:$true] %s16
      %22 = dma.hbm_to_vmem [thread:$0]  %s0, 128, %s17, [#allocation3], 64, 64, 4
    $region5: #{tpu_custom_call.1} parent=1 // pred_fallthru
      _
    // Predicated region
    $region6: #{tpu_custom_call.1} parent=1 // pred_check
      _
    $region7: #{tpu_custom_call.1} parent=1 // pred_check_branch
      %24 = sbr.rel (0) target = $region9
    $region8: #{tpu_custom_call.1} parent=1 // pred_region
      %s26 = ssub.s32 3072, 3072
      %27 = vsyncadd [#allocation6], %s26
      %s28 = sshll.u32 [#allocation5], 4
      %s29 = int_to_ptr.vmem [resolvable:$true] %s28
      %34 = dma.hbm_to_vmem [thread:$0]  %s1, 3072, %s29, [#allocation6], 192, 192, 12
    $region9: #{tpu_custom_call.1} parent=1 // pred_fallthru
      _
    // Predicated region
    $region10: #{tpu_custom_call.1} parent=1 // pred_check
      _
    $region11: #{tpu_custom_call.1} parent=1 // pred_check_branch
      %36 = sbr.rel (0) target = $region13
    $region12: #{tpu_custom_call.1} parent=1 // pred_region
      %s38 = ssub.s32 48, 48
      %39 = vsyncadd [#allocation6], %s38
      %s41 = sshll.u32 [#allocation7], 4
      %s42 = int_to_ptr.vmem [resolvable:$true] %s41
      %44 = dma.hbm_to_vmem [thread:$0]  %s2, 48, %s42, [#allocation6]
    $region13: #{tpu_custom_call.1} parent=1 // pred_fallthru
      _
    // Predicated region
    $region14: #{tpu_custom_call.1} parent=1 // pred_check
      _
    $region15: #{tpu_custom_call.1} parent=1 // pred_check_branch
      %46 = sbr.rel (0) target = $region17
    $region16: #{tpu_custom_call.1} parent=1 // pred_region
      %47 = dma.done [#allocation3], 128
    $region17: #{tpu_custom_call.1} parent=1 // pred_fallthru
      _
    // Predicated region
    $region18: #{tpu_custom_call.1} parent=1 // pred_check
      _
    $region19: #{tpu_custom_call.1} parent=1 // pred_check_branch
      %49 = sbr.rel (0) target = $region21
    $region20: #{tpu_custom_call.1} parent=1 // pred_region
      %50 = dma.done [#allocation6], 3072
    $region21: #{tpu_custom_call.1} parent=1 // pred_fallthru
      _
    // Predicated region
    $region22: #{tpu_custom_call.1} parent=1 // pred_check
      _
    $region23: #{tpu_custom_call.1} parent=1 // pred_check_branch
      %52 = sbr.rel (0) target = $region25
    $region24: #{tpu_custom_call.1} parent=1 // pred_region
      %53 = dma.done [#allocation6], 48
    $region25: #{tpu_custom_call.1} parent=1 // pred_fallthru
      _
    %v55 = vld [vmem:[#allocation2] sm:$0xf]
    %v56 = vld [vmem:[#allocation2 + $0x4] sm:$0xf]
    %v57 = vld [vmem:[#allocation5] sm:$0xff]
    %v58 = vld [vmem:[#allocation5 + $0x8] sm:$0xf]
    %v59 = vld [vmem:[#allocation5 + $0xc] sm:$0xff]
    %v60 = vld [vmem:[#allocation5 + $0x14] sm:$0xf]
    %v61 = vld [vmem:[#allocation5 + $0x18] sm:$0xff]
    %v62 = vld [vmem:[#allocation5 + $0x20] sm:$0xf]
    %v63 = vld [vmem:[#allocation5 + $0x24] sm:$0xff]
    %v64 = vld [vmem:[#allocation5 + $0x2c] sm:$0xf]
    %v65 = vld [vmem:[#allocation5 + $0x30] sm:$0xff]
    %v66 = vld [vmem:[#allocation5 + $0x38] sm:$0xf]
    %v67 = vld [vmem:[#allocation5 + $0x3c] sm:$0xff]
    %v68 = vld [vmem:[#allocation5 + $0x44] sm:$0xf]
    %v69 = vld [vmem:[#allocation5 + $0x48] sm:$0xff]
    %v70 = vld [vmem:[#allocation5 + $0x50] sm:$0xf]
    %v71 = vld [vmem:[#allocation5 + $0x54] sm:$0xff]
    %v72 = vld [vmem:[#allocation5 + $0x5c] sm:$0xf]
    %v73 = vld [vmem:[#allocation5 + $0x60] sm:$0xff]
    %v74 = vld [vmem:[#allocation5 + $0x68] sm:$0xf]
    %v75 = vld [vmem:[#allocation5 + $0x6c] sm:$0xff]
    %v76 = vld [vmem:[#allocation5 + $0x74] sm:$0xf]
    %v77 = vld [vmem:[#allocation5 + $0x78] sm:$0xff]
    %v78 = vld [vmem:[#allocation5 + $0x80] sm:$0xf]
    %v79 = vld [vmem:[#allocation5 + $0x84] sm:$0xff]
    %v80 = vld [vmem:[#allocation5 + $0x8c] sm:$0xf]
    %v81 = vld [vmem:[#allocation5 + $0x90] sm:$0xff]
    %v82 = vld [vmem:[#allocation5 + $0x98] sm:$0xf]
    %v83 = vld [vmem:[#allocation5 + $0x9c] sm:$0xff]
    %v84 = vld [vmem:[#allocation5 + $0xa4] sm:$0xf]
    %v85 = vld [vmem:[#allocation5 + $0xa8] sm:$0xff]
    %v86 = vld [vmem:[#allocation5 + $0xb0] sm:$0xf]
    %v87 = vld [vmem:[#allocation5 + $0xb4] sm:$0xff]
    %v88 = vld [vmem:[#allocation5 + $0xbc] sm:$0xf]
    %v89 = vld [vmem:[#allocation7] sm:$0x7]
    %v91 = vlaneseq
    %v92 = vshrl.u32 %v91, 7
    %v93 = vsub.s32 0, %v92
    %v94 = vrot.slane %v89, %v93
    %v95 = vlaneseq
    %v96 = vshrl.u32 %v95, 7
    %v97 = vsub.s32 1, %v96
    %v98 = vrot.slane %v89, %v97
    %v99 = vlaneseq
    %v100 = vshrl.u32 %v99, 7
    %v101 = vsub.s32 2, %v100
    %v102 = vrot.slane %v89, %v101
    %v108 = vunpack.c.l.b16 %v55
    %v109 = vunpack.c.l.b16 %v56
    %v110 = vpack.c.b16 %v109, %v108
    %v144 = vunpack.c.l.b16 %v57
    %v145 = vunpack.c.h.b16 %v57
    %v146 = vunpack.c.l.b16 %v58
    %v147 = vunpack.c.l.b16 %v59
    %v148 = vunpack.c.h.b16 %v59
    %v149 = vunpack.c.l.b16 %v60
    %v150 = vunpack.c.l.b16 %v61
    %v151 = vunpack.c.h.b16 %v61
    %v152 = vunpack.c.l.b16 %v62
    %v153 = vunpack.c.l.b16 %v63
    %v154 = vunpack.c.h.b16 %v63
    %v155 = vunpack.c.l.b16 %v64
    %v156 = vunpack.c.l.b16 %v65
    %v157 = vunpack.c.h.b16 %v65
    %v158 = vunpack.c.l.b16 %v66
    %v159 = vunpack.c.l.b16 %v67
    %v160 = vunpack.c.h.b16 %v67
    %v161 = vunpack.c.l.b16 %v68
    %v162 = vunpack.c.l.b16 %v69
    %v163 = vunpack.c.h.b16 %v69
    %v164 = vunpack.c.l.b16 %v70
    %v165 = vunpack.c.l.b16 %v71
    %v166 = vunpack.c.h.b16 %v71
    %v167 = vunpack.c.l.b16 %v72
    %v168 = vunpack.c.l.b16 %v73
    %v169 = vunpack.c.h.b16 %v73
    %v170 = vunpack.c.l.b16 %v74
    %v171 = vunpack.c.l.b16 %v75
    %v172 = vunpack.c.h.b16 %v75
    %v173 = vunpack.c.l.b16 %v76
    %v174 = vunpack.c.l.b16 %v77
    %v175 = vunpack.c.h.b16 %v77
    %v176 = vunpack.c.l.b16 %v78
    %v177 = vunpack.c.l.b16 %v79
    %v178 = vunpack.c.h.b16 %v79
    %v179 = vunpack.c.l.b16 %v80
    %v180 = vunpack.c.l.b16 %v81
    %v181 = vunpack.c.h.b16 %v81
    %v182 = vunpack.c.l.b16 %v82
    %v183 = vunpack.c.l.b16 %v83
    %v184 = vunpack.c.h.b16 %v83
    %v185 = vunpack.c.l.b16 %v84
    %v186 = vunpack.c.l.b16 %v85
    %v187 = vunpack.c.h.b16 %v85
    %v188 = vunpack.c.l.b16 %v86
    %v189 = vunpack.c.l.b16 %v87
    %v190 = vunpack.c.h.b16 %v87
    %v191 = vunpack.c.l.b16 %v88
    %v192 = vpack.c.b16 %v147, %v144
    %v193 = vpack.c.b16 %v148, %v145
    %v194 = vpack.c.b16 %v149, %v146
    %v195 = vpack.c.b16 %v153, %v150
    %v196 = vpack.c.b16 %v154, %v151
    %v197 = vpack.c.b16 %v155, %v152
    %v198 = vpack.c.b16 %v159, %v156
    %v199 = vpack.c.b16 %v160, %v157
    %v200 = vpack.c.b16 %v161, %v158
    %v201 = vpack.c.b16 %v165, %v162
    %v202 = vpack.c.b16 %v166, %v163
    %v203 = vpack.c.b16 %v167, %v164
    %v204 = vpack.c.b16 %v171, %v168
    %v205 = vpack.c.b16 %v172, %v169
    %v206 = vpack.c.b16 %v173, %v170
    %v207 = vpack.c.b16 %v177, %v174
    %v208 = vpack.c.b16 %v178, %v175
    %v209 = vpack.c.b16 %v179, %v176
    %v210 = vpack.c.b16 %v183, %v180
    %v211 = vpack.c.b16 %v184, %v181
    %v212 = vpack.c.b16 %v185, %v182
    %v213 = vpack.c.b16 %v189, %v186
    %v214 = vpack.c.b16 %v190, %v187
    %v215 = vpack.c.b16 %v191, %v188
    %240 = vmatprep.subr.bf16.mxu0 %v193
    %241 = vmatpush1.bf16.msra.mxu0 %v192
    %242 = vmatprep.subr.bf16.mxu0 %v196
    %243 = vmatpush1.bf16.msra.mxu0 %v195
    %244 = vmatprep.subr.bf16.mxu0 %v199
    %245 = vmatpush1.bf16.msra.mxu0 %v198
    %246 = vmatprep.subr.bf16.mxu0 %v202
    %247 = vmatpush1.bf16.msra.mxu0 %v201
    %248 = vmatprep.subr.bf16.mxu0 %v205
    %249 = vmatpush1.bf16.msra.mxu0 %v204
    %250 = vmatprep.subr.bf16.mxu0 %v208
    %251 = vmatpush1.bf16.msra.mxu0 %v207
    %252 = vmatprep.subr.bf16.mxu0 %v211
    %253 = vmatpush1.bf16.msra.mxu0 %v210
    %254 = vmatprep.subr.bf16.mxu0 %v214
    %255 = vmatpush1.bf16.msra.mxu0 %v213
    %256 = vmatprep.subr.bf16.mxu0 0
    %257 = vmatpush1.bf16.msra.mxu0 0
    %258 = vmatprep.subr.bf16.mxu0 0
    %259 = vmatpush1.bf16.msra.mxu0 0
    %260 = vmatprep.subr.bf16.mxu0 0
    %261 = vmatpush1.bf16.msra.mxu0 0
    %262 = vmatprep.subr.bf16.mxu0 0
    %263 = vmatpush1.bf16.msra.mxu0 0
    %264 = vmatprep.subr.bf16.mxu0 0
    %265 = vmatpush1.bf16.msra.mxu0 0
    %266 = vmatprep.subr.bf16.mxu0 0
    %267 = vmatpush1.bf16.msra.mxu0 0
    %268 = vmatprep.subr.bf16.mxu0 0
    %269 = vmatpush1.bf16.msra.mxu0 0
    %270 = vmatprep.subr.bf16.mxu0 0
    %271 = vmatpush1.bf16.msra.mxu0 0
    %272 = vmatprep.mubr.bf16.mxu0 0
    %273 = vmatmul.mubr.bf16.gmra.mrb[0].mxu0 %v110
    %v274 = vpop.f32.mrb[0].mxu0
    %v275 = vadd.f32 %v94, %v274
    %v276 = vpop.f32.mrb[0].mxu0
    %v277 = vadd.f32 %v98, %v276
    %v278 = vpop.f32.mrb[0].mxu0
    %v279 = vadd.f32 %v94, %v278
    %v280 = vpop.f32.mrb[0].mxu0
    %v281 = vadd.f32 %v98, %v280
    %282 = vdwg.mxu0
    %283 = vmatprep.subr.bf16.mxu0 0
    %284 = vmatpush1.bf16.msra.mxu0 %v194
    %285 = vmatprep.subr.bf16.mxu0 0
    %286 = vmatpush1.bf16.msra.mxu0 %v197
    %287 = vmatprep.subr.bf16.mxu0 0
    %288 = vmatpush1.bf16.msra.mxu0 %v200
    %289 = vmatprep.subr.bf16.mxu0 0
    %290 = vmatpush1.bf16.msra.mxu0 %v203
    %291 = vmatprep.subr.bf16.mxu0 0
    %292 = vmatpush1.bf16.msra.mxu0 %v206
    %293 = vmatprep.subr.bf16.mxu0 0
    %294 = vmatpush1.bf16.msra.mxu0 %v209
    %295 = vmatprep.subr.bf16.mxu0 0
    %296 = vmatpush1.bf16.msra.mxu0 %v212
    %297 = vmatprep.subr.bf16.mxu0 0
    %298 = vmatpush1.bf16.msra.mxu0 %v215
    %299 = vmatprep.subr.bf16.mxu0 0
    %300 = vmatpush1.bf16.msra.mxu0 0
    %301 = vmatprep.subr.bf16.mxu0 0
    %302 = vmatpush1.bf16.msra.mxu0 0
    %303 = vmatprep.subr.bf16.mxu0 0
    %304 = vmatpush1.bf16.msra.mxu0 0
    %305 = vmatprep.subr.bf16.mxu0 0
    %306 = vmatpush1.bf16.msra.mxu0 0
    %307 = vmatprep.subr.bf16.mxu0 0
    %308 = vmatpush1.bf16.msra.mxu0 0
    %309 = vmatprep.subr.bf16.mxu0 0
    %310 = vmatpush1.bf16.msra.mxu0 0
    %311 = vmatprep.subr.bf16.mxu0 0
    %312 = vmatpush1.bf16.msra.mxu0 0
    %313 = vmatprep.subr.bf16.mxu0 0
    %314 = vmatpush1.bf16.msra.mxu0 0
    %315 = vmatprep.mubr.bf16.mxu0 0
    %316 = vmatmul.mubr.bf16.gmra.mrb[0].mxu0 %v110
    %v317 = vpop.f32.mrb[0].mxu0
    %v318 = vadd.f32 %v102, %v317
    %v319 = vpop.f32.mrb[0].mxu0
    %v320 = vpop.f32.mrb[0].mxu0
    %v321 = vadd.f32 %v102, %v320
    %v322 = vpop.f32.mrb[0].mxu0
    %323 = vdwg.mxu0
    %v324 = vpack.c.bf16 %v279, %v275
    %v325 = vpack.c.bf16 %v281, %v277
    %v326 = vpack.c.bf16 %v321, %v318
    %v330 = vunpack.c.l.b16 %v324
    %v331 = vunpack.c.l.b16 %v325
    %v332 = vunpack.c.l.b16 %v326
    %v333 = vunpack.c.h.b16 %v324
    %v334 = vunpack.c.h.b16 %v325
    %v335 = vunpack.c.h.b16 %v326
    %v336 = vpack.c.b16 %v331, %v330
    %v337 = vpack.c.b16 %v332, %v332
    %v338 = vpack.c.b16 %v334, %v333
    %v339 = vpack.c.b16 %v335, %v335
    %344 = vst [vmem:[#allocation8] sm:$0xff] %v336
    %345 = vst [vmem:[#allocation8 + $0x8] sm:$0xf] %v337
    %346 = vst [vmem:[#allocation8 + $0xc] sm:$0xff] %v338
    %347 = vst [vmem:[#allocation8 + $0x14] sm:$0xf] %v339
    // Predicated region
    $region26: #{tpu_custom_call.1} parent=1 // pred_check
      _
    $region27: #{tpu_custom_call.1} parent=1 // pred_check_branch
      %349 = sbr.rel (0) target = $region29
    $region28: #{tpu_custom_call.1} parent=1 // pred_region
      %s351 = ssub.s32 384, 384
      %352 = vsyncadd [#allocation4], %s351
      %s353 = sshll.u32 [#allocation8], 4
      %s354 = int_to_ptr.vmem [resolvable:$true] %s353
      %359 = dma.vmem_to_hbm [thread:$0]  %s354, 384, %s3, [#allocation4], 192, 192, 12
    $region29: #{tpu_custom_call.1} parent=1 // pred_fallthru
      _
    // Predicated region
    $region30: #{tpu_custom_call.1} parent=1 // pred_check
      _
    $region31: #{tpu_custom_call.1} parent=1 // pred_check_branch
      %361 = sbr.rel (0) target = $region33
    $region32: #{tpu_custom_call.1} parent=1 // pred_region
      %362 = dma.done [#allocation4], 384
    $region33: #{tpu_custom_call.1} parent=1 // pred_fallthru
      _
    %363 = vsyncpa [#allocation3], 1
    %364 = vsyncpa [#allocation6], 1
    %365 = vsyncpa [#allocation4], 1

</llo_original>
